<compile_context>
chip_gen: v7x
topology: tpu7x:2x2x1
jax: 0.10.0
libtpu: 0.0.40
codegen_flags: <defaults>
</compile_context>

<pallas_src>
import jax
import jax.numpy as jnp
from jax.experimental import pallas as pl
from jax.experimental.pallas import tpu as pltpu


def _gate_kernel(x_ref, h_ref, w1_ref, b1_ref, w2_ref, b2_ref,
                 w1g_ref, w2g_ref, bg_ref, o_ref):
    x = x_ref[...]
    h = h_ref[...]
    if x.dtype != jnp.bfloat16:          # skip cast if caller already feeds bf16
        x = x.astype(jnp.bfloat16)
    if h.dtype != jnp.bfloat16:
        h = h.astype(jnp.bfloat16)

    # Stage 1: the two nn.Linear projections (bf16 operands, f32 accumulation).
    u = jnp.dot(x, w1_ref[...], preferred_element_type=jnp.float32) + b1_ref[...]
    v = jnp.dot(h, w2_ref[...], preferred_element_type=jnp.float32) + b2_ref[...]

    # Stage 2: gate = sigmoid(u @ w1^T + v @ w2^T + bias).
    # Two back-to-back K=H MXU dots; no [rows, 2H] concat copy in VMEM.
    gated = (jnp.dot(u.astype(jnp.bfloat16), w1g_ref[...],
                     preferred_element_type=jnp.float32)
             + jnp.dot(v.astype(jnp.bfloat16), w2g_ref[...],
                       preferred_element_type=jnp.float32)
             + bg_ref[...])
    g = jax.nn.sigmoid(gated)

    # output = u*g + v*(1-g) == v + g*(u - v)   (f32 blend, cast on store)
    o_ref[...] = (v + g * (u - v)).astype(o_ref.dtype)


def _pick_block_rows(batch, max_rows=1024):
    """Largest divisor of `batch` <= cap.  The cap shrinks for large batches so
    the grid has >= 2 steps (v7x megacore can shard the 'parallel' axis)."""
    cap = min(max_rows, batch if batch <= 512 else max(256, batch // 2))
    cap = max(cap, 1)
    for d in range(cap, 0, -1):
        if batch % d == 0:
            return d
    return batch


def linear_gate_add_pallas(x, h, w1_lin, b1, w2_lin, b2, w1g_t, w2g_t, bg,
                           *, block_rows=None):
    """x, h: [B, H] (f32 or bf16).
    w1_lin/w2_lin: [H, H] bf16, pre-transposed so the kernel does x @ W.
    w1g_t/w2g_t:   [H, H] bf16, gate weights already transposed (u @ w1.T).
    b1/b2/bg:      [1, H] f32 (lane-dense)."""
    B, H = x.shape
    assert h.shape == (B, H)
    # Perf note: H should be a multiple of 128 (lane width) to avoid masked
    # partial stores; block_shape == full H keeps any H legal, just slower.
    if block_rows is None:
        block_rows = _pick_block_rows(B)
    assert B % block_rows == 0, "block_rows must divide the batch"
    grid = (B // block_rows,)

    row_spec = pl.BlockSpec((block_rows, H), lambda i: (i, 0))

    def resident(arr):
        # Grid-invariant operand: fetched once, single-buffered (its block
        # index never changes, so double-buffering would be pure VMEM waste).
        return pl.BlockSpec(arr.shape, lambda i: (0, 0),
                            pipeline_mode=pl.Buffered(1))

    weights = (w1_lin, w2_lin, w1g_t, w2g_t)
    biases = (b1, b2, bg)
    weight_bytes = sum(a.size * a.dtype.itemsize for a in weights)
    bias_bytes = sum(a.size * a.dtype.itemsize for a in biases)
    act_io_bytes = (2 * 2 * block_rows * H * x.dtype.itemsize   # x, h double-buffered
                    + 2 * block_rows * H * x.dtype.itemsize)    # out double-buffered
    scratch_bytes = 8 * block_rows * H * 4                       # u, v, gated, temps (f32)
    vmem_need = weight_bytes + bias_bytes + act_io_bytes + scratch_bytes
    # 2x headroom, 32 MiB floor (beats v5e's 16 MiB default), 56 MiB ceiling
    # (safe per-TC on v7x; well under v5e/v6e 128 MiB physical).
    vmem_limit = int(min(max(2 * vmem_need, 32 << 20), 56 << 20))

    flops = 8 * B * H * H                      # 4 MXU dots, 2*B*H*H each
    bytes_accessed = (weight_bytes + bias_bytes
                      + 3 * B * H * x.dtype.itemsize)  # x, h in + out

    return pl.pallas_call(
        _gate_kernel,
        out_shape=jax.ShapeDtypeStruct((B, H), x.dtype),
        grid=grid,
        in_specs=[
            row_spec, row_spec,
            resident(w1_lin), resident(b1),
            resident(w2_lin), resident(b2),
            resident(w1g_t), resident(w2g_t), resident(bg),
        ],
        out_specs=row_spec,
        compiler_params=pltpu.CompilerParams(
            dimension_semantics=("parallel",),
            vmem_limit_bytes=vmem_limit,
        ),
        cost_estimate=pl.CostEstimate(
            flops=flops, transcendentals=B * H,
            bytes_accessed=bytes_accessed),
    )(x, h, w1_lin, b1, w2_lin, b2, w1g_t, w2g_t, bg)


def linear_gate_add_reference(x, h, w1_lin, b1, w2_lin, b2, w1g_t, w2g_t, bg):
    """Pure-JAX f32 reference mirroring the PyTorch forward (weights may be
    bf16-stored; all math is done in f32)."""
    f32 = lambda a: a.astype(jnp.float32)
    u = f32(x) @ f32(w1_lin) + f32(b1)
    v = f32(h) @ f32(w2_lin) + f32(b2)
    gated = u @ f32(w1g_t) + v @ f32(w2g_t) + f32(bg)
    g = jax.nn.sigmoid(gated)
    return u * g + v * (1.0 - g)


if __name__ == "__main__":
    batch = 8
    hidden = 128

    key = jax.random.PRNGKey(0)
    ks = jax.random.split(key, 9)
    bound = 1.0 / (hidden ** 0.5)   # matches reset_parameters (stdv1==stdv2==stdv)

    x = jax.random.normal(ks[0], (batch, hidden), dtype=jnp.float32)
    h = jax.random.normal(ks[1], (batch, hidden), dtype=jnp.float32)

    # nn.Linear weights are [out, in] in torch; stored pre-transposed [in, out]
    # so the kernel computes x @ W  (== x @ weight.T in torch).
    w1_lin = jax.random.uniform(ks[2], (hidden, hidden), jnp.float32, -bound, bound)
    w2_lin = jax.random.uniform(ks[3], (hidden, hidden), jnp.float32, -bound, bound)
    b1 = jax.random.uniform(ks[4], (1, hidden), jnp.float32, -bound, bound)
    b2 = jax.random.uniform(ks[5], (1, hidden), jnp.float32, -bound, bound)

    # Gate parameters w1, w2 ([H, H]) are applied as .t() in torch -> store transposed.
    w1 = jax.random.uniform(ks[6], (hidden, hidden), jnp.float32, -bound, bound)
    w2 = jax.random.uniform(ks[7], (hidden, hidden), jnp.float32, -bound, bound)
    bias = jax.random.uniform(ks[8], (1, hidden), jnp.float32, -bound, bound)
    w1g_t = w1.T
    w2g_t = w2.T

    # bf16 weight storage (HBM weight traffic halved); MXU accumulates in f32.
    to_bf = lambda a: a.astype(jnp.bfloat16)

    out = linear_gate_add_pallas(x, h, to_bf(w1_lin), b1, to_bf(w2_lin), b2,
                                 to_bf(w1g_t), to_bf(w2g_t), bias)
    out = jax.block_until_ready(out)

    # Reference uses the same bf16-stored weights in f32 math; remaining error
    # comes only from the in-kernel bf16 casts of x/h/u/v (documented numerics
    # change vs the pure-f32 PyTorch module).
    ref = linear_gate_add_reference(x, h, to_bf(w1_lin), b1, to_bf(w2_lin), b2,
                                    to_bf(w1g_t), to_bf(w2g_t), bias)

    assert out.shape == (batch, hidden)
    err = float(jnp.max(jnp.abs(out - ref)))
    assert jnp.allclose(out, ref, atol=3e-2, rtol=3e-2), (
        "mismatch vs reference, max abs err = %f" % err)

    print("KERNEL_OK")
</pallas_src>

<mosaic_0001>
module attributes {stable_mosaic.version = 11 : i64} {
  func.func @_gate_kernel(%arg0: i32, %arg1: memref<8x128xf32, #tpu.memory_space<vmem>>, %arg2: memref<8x128xf32, #tpu.memory_space<vmem>>, %arg3: memref<128x128xbf16, #tpu.memory_space<vmem>>, %arg4: memref<1x128xf32, #tpu.memory_space<vmem>>, %arg5: memref<128x128xbf16, #tpu.memory_space<vmem>>, %arg6: memref<1x128xf32, #tpu.memory_space<vmem>>, %arg7: memref<128x128xbf16, #tpu.memory_space<vmem>>, %arg8: memref<128x128xbf16, #tpu.memory_space<vmem>>, %arg9: memref<1x128xf32, #tpu.memory_space<vmem>>, %arg10: memref<8x128xf32, #tpu.memory_space<vmem>>) attributes {dimension_semantics = [#tpu.dimension_semantics<parallel>], iteration_bounds = array<i64: 1>, scalar_prefetch = 0 : i64, scratch_operands = 0 : i64, tpu.core_type = #tpu.core_type<tc>, window_params = [{transform_indices = @transform_0, window_bounds = array<i64: 8, 128>}, {transform_indices = @transform_1, window_bounds = array<i64: 8, 128>}, {pipeline_mode = #tpu.pipeline_mode<synchronous>, transform_indices = @transform_2, window_bounds = array<i64: 128, 128>}, {pipeline_mode = #tpu.pipeline_mode<synchronous>, transform_indices = @transform_3, window_bounds = array<i64: 1, 128>}, {pipeline_mode = #tpu.pipeline_mode<synchronous>, transform_indices = @transform_4, window_bounds = array<i64: 128, 128>}, {pipeline_mode = #tpu.pipeline_mode<synchronous>, transform_indices = @transform_5, window_bounds = array<i64: 1, 128>}, {pipeline_mode = #tpu.pipeline_mode<synchronous>, transform_indices = @transform_6, window_bounds = array<i64: 128, 128>}, {pipeline_mode = #tpu.pipeline_mode<synchronous>, transform_indices = @transform_7, window_bounds = array<i64: 128, 128>}, {pipeline_mode = #tpu.pipeline_mode<synchronous>, transform_indices = @transform_8, window_bounds = array<i64: 1, 128>}, {transform_indices = @transform_9, window_bounds = array<i64: 8, 128>}]} {
    %c0 = arith.constant 0 : index
    %c0_0 = arith.constant 0 : index
    %0 = vector.load %arg1[%c0, %c0_0] : memref<8x128xf32, #tpu.memory_space<vmem>>, vector<8x128xf32>
    %c0_1 = arith.constant 0 : index
    %c0_2 = arith.constant 0 : index
    %1 = vector.load %arg2[%c0_1, %c0_2] : memref<8x128xf32, #tpu.memory_space<vmem>>, vector<8x128xf32>
    %2 = arith.truncf %0 : vector<8x128xf32> to vector<8x128xbf16>
    %3 = arith.truncf %1 : vector<8x128xf32> to vector<8x128xbf16>
    %c0_3 = arith.constant 0 : index
    %c0_4 = arith.constant 0 : index
    %4 = vector.load %arg3[%c0_3, %c0_4] : memref<128x128xbf16, #tpu.memory_space<vmem>>, vector<128x128xbf16>
    %cst = arith.constant dense<0.000000e+00> : vector<8x128xf32>
    %5 = tpu.matmul %2, %4, %cst {dimension_numbers = #tpu.dot_dimension_numbers<[1], [0], [0], [1], [0, 0, 1, 1], [], []>} : vector<8x128xbf16>, vector<128x128xbf16>, vector<8x128xf32> -> vector<8x128xf32>
    %c0_5 = arith.constant 0 : index
    %c0_6 = arith.constant 0 : index
    %6 = vector.load %arg4[%c0_5, %c0_6] : memref<1x128xf32, #tpu.memory_space<vmem>>, vector<1x128xf32>
    %7 = vector.broadcast %6 : vector<1x128xf32> to vector<8x128xf32>
    %8 = arith.addf %5, %7 : vector<8x128xf32>
    %c0_7 = arith.constant 0 : index
    %c0_8 = arith.constant 0 : index
    %9 = vector.load %arg5[%c0_7, %c0_8] : memref<128x128xbf16, #tpu.memory_space<vmem>>, vector<128x128xbf16>
    %cst_9 = arith.constant dense<0.000000e+00> : vector<8x128xf32>
    %10 = tpu.matmul %3, %9, %cst_9 {dimension_numbers = #tpu.dot_dimension_numbers<[1], [0], [0], [1], [0, 0, 1, 1], [], []>} : vector<8x128xbf16>, vector<128x128xbf16>, vector<8x128xf32> -> vector<8x128xf32>
    %c0_10 = arith.constant 0 : index
    %c0_11 = arith.constant 0 : index
    %11 = vector.load %arg6[%c0_10, %c0_11] : memref<1x128xf32, #tpu.memory_space<vmem>>, vector<1x128xf32>
    %12 = vector.broadcast %11 : vector<1x128xf32> to vector<8x128xf32>
    %13 = arith.addf %10, %12 : vector<8x128xf32>
    %14 = arith.truncf %8 : vector<8x128xf32> to vector<8x128xbf16>
    %c0_12 = arith.constant 0 : index
    %c0_13 = arith.constant 0 : index
    %15 = vector.load %arg7[%c0_12, %c0_13] : memref<128x128xbf16, #tpu.memory_space<vmem>>, vector<128x128xbf16>
    %cst_14 = arith.constant dense<0.000000e+00> : vector<8x128xf32>
    %16 = tpu.matmul %14, %15, %cst_14 {dimension_numbers = #tpu.dot_dimension_numbers<[1], [0], [0], [1], [0, 0, 1, 1], [], []>} : vector<8x128xbf16>, vector<128x128xbf16>, vector<8x128xf32> -> vector<8x128xf32>
    %17 = arith.truncf %13 : vector<8x128xf32> to vector<8x128xbf16>
    %c0_15 = arith.constant 0 : index
    %c0_16 = arith.constant 0 : index
    %18 = vector.load %arg8[%c0_15, %c0_16] : memref<128x128xbf16, #tpu.memory_space<vmem>>, vector<128x128xbf16>
    %cst_17 = arith.constant dense<0.000000e+00> : vector<8x128xf32>
    %19 = tpu.matmul %17, %18, %cst_17 {dimension_numbers = #tpu.dot_dimension_numbers<[1], [0], [0], [1], [0, 0, 1, 1], [], []>} : vector<8x128xbf16>, vector<128x128xbf16>, vector<8x128xf32> -> vector<8x128xf32>
    %20 = arith.addf %16, %19 : vector<8x128xf32>
    %c0_18 = arith.constant 0 : index
    %c0_19 = arith.constant 0 : index
    %21 = vector.load %arg9[%c0_18, %c0_19] : memref<1x128xf32, #tpu.memory_space<vmem>>, vector<1x128xf32>
    %22 = vector.broadcast %21 : vector<1x128xf32> to vector<8x128xf32>
    %23 = arith.addf %20, %22 : vector<8x128xf32>
    %24 = arith.negf %23 : vector<8x128xf32>
    %25 = math.exp %24 : vector<8x128xf32>
    %cst_20 = arith.constant 1.000000e+00 : f32
    %26 = vector.broadcast %cst_20 : f32 to vector<8x128xf32>
    %27 = arith.addf %26, %25 : vector<8x128xf32>
    %28 = arith.divf %26, %27 : vector<8x128xf32>
    %29 = arith.subf %8, %13 : vector<8x128xf32>
    %30 = arith.mulf %28, %29 : vector<8x128xf32>
    %31 = arith.addf %13, %30 : vector<8x128xf32>
    %c0_21 = arith.constant 0 : index
    %c0_22 = arith.constant 0 : index
    %32 = vector.load %arg10[%c0_21, %c0_22] : memref<8x128xf32, #tpu.memory_space<vmem>>, vector<8x128xf32>
    tpu.vector_store %arg10[%c0_21, %c0_22], %31 {strides = array<i32>} : memref<8x128xf32, #tpu.memory_space<vmem>>, vector<8x128xf32>,
    return
  }
  func.func @transform_0(%arg0: i32) -> (i32, i32) {
    %c0_i32 = arith.constant 0 : i32
    %c0_i32_0 = arith.constant 0 : i32
    return %arg0, %c0_i32 : i32, i32
  }
  func.func @transform_1(%arg0: i32) -> (i32, i32) {
    %c0_i32 = arith.constant 0 : i32
    %c0_i32_0 = arith.constant 0 : i32
    return %arg0, %c0_i32 : i32, i32
  }
  func.func @transform_2(%arg0: i32) -> (i32, i32) {
    %c0_i32 = arith.constant 0 : i32
    %c0_i32_0 = arith.constant 0 : i32
    %c0_i32_1 = arith.constant 0 : i32
    return %c0_i32, %c0_i32_0 : i32, i32
  }
  func.func @transform_3(%arg0: i32) -> (i32, i32) {
    %c0_i32 = arith.constant 0 : i32
    %c0_i32_0 = arith.constant 0 : i32
    %c0_i32_1 = arith.constant 0 : i32
    return %c0_i32, %c0_i32_0 : i32, i32
  }
  func.func @transform_4(%arg0: i32) -> (i32, i32) {
    %c0_i32 = arith.constant 0 : i32
    %c0_i32_0 = arith.constant 0 : i32
    %c0_i32_1 = arith.constant 0 : i32
    return %c0_i32, %c0_i32_0 : i32, i32
  }
  func.func @transform_5(%arg0: i32) -> (i32, i32) {
    %c0_i32 = arith.constant 0 : i32
    %c0_i32_0 = arith.constant 0 : i32
    %c0_i32_1 = arith.constant 0 : i32
    return %c0_i32, %c0_i32_0 : i32, i32
  }
  func.func @transform_6(%arg0: i32) -> (i32, i32) {
    %c0_i32 = arith.constant 0 : i32
    %c0_i32_0 = arith.constant 0 : i32
    %c0_i32_1 = arith.constant 0 : i32
    return %c0_i32, %c0_i32_0 : i32, i32
  }
  func.func @transform_7(%arg0: i32) -> (i32, i32) {
    %c0_i32 = arith.constant 0 : i32
    %c0_i32_0 = arith.constant 0 : i32
    %c0_i32_1 = arith.constant 0 : i32
    return %c0_i32, %c0_i32_0 : i32, i32
  }
  func.func @transform_8(%arg0: i32) -> (i32, i32) {
    %c0_i32 = arith.constant 0 : i32
    %c0_i32_0 = arith.constant 0 : i32
    %c0_i32_1 = arith.constant 0 : i32
    return %c0_i32, %c0_i32_0 : i32, i32
  }
  func.func @transform_9(%arg0: i32) -> (i32, i32) {
    %c0_i32 = arith.constant 0 : i32
    %c0_i32_0 = arith.constant 0 : i32
    return %arg0, %c0_i32 : i32, i32
  }
}

</mosaic_0001>

<llo_original>
// kernel: tpu_custom_call.1
$region0: #{tpu_custom_call.1}
  #allocation0 [shape = 'u32[]', space=smem, size = 0x4, offset = 0x4, fixed_abs, tag = 'smem constant byte address 0x4 - core index']
  #allocation1 [shape = 'u32[144,128]{1,0:T(1,128)}', space=vmem, size = 0x12000, scoped, tag = 'internal scratch']
  %s0 = inlined_call_operand.hbm [shape: f32[8,128], index: 0, kind: input, shape index: {}]
  %s1 = inlined_call_operand.hbm [shape: f32[8,128], index: 1, kind: input, shape index: {}]
  %s2 = inlined_call_operand.hbm [shape: bf16[128,128], index: 2, kind: input, shape index: {}]
  %s3 = inlined_call_operand.vmem [shape: f32[1,128], index: 3, kind: input, shape index: {}]
  %s4 = inlined_call_operand.hbm [shape: bf16[128,128], index: 4, kind: input, shape index: {}]
  %s5 = inlined_call_operand.vmem [shape: f32[1,128], index: 5, kind: input, shape index: {}]
  %s6 = inlined_call_operand.hbm [shape: bf16[128,128], index: 6, kind: input, shape index: {}]
  %s7 = inlined_call_operand.hbm [shape: bf16[128,128], index: 7, kind: input, shape index: {}]
  %s8 = inlined_call_operand.vmem [shape: f32[1,128], index: 8, kind: input, shape index: {}]
  %s9 = inlined_call_operand.hbm [shape: f32[8,128], index: 9, kind: output, shape index: {}]
  %s10 = sld [smem:[#allocation0]]
  $region70: #{tpu_custom_call.1} parent=0
    _
  %s12 = ssub.s32 1, %s10
  %s13 = scalar_select 0, %s12, %s10
  $region1: #{tpu_custom_call.1} parent=0
    #allocation2 [shape = 'u8[4096]{0}', space=vmem, size = 0x1000, scoped, tag = 'input window, operand 0, single buffered']
    #allocation3 [shape = 's32[1]{0}', space=sflag, size = 0x4, scoped, tag = 'scoped memory for tpu_custom_call.1']
    #allocation4 [shape = 's32[1]{0}', space=sflag, size = 0x4, scoped, tag = 'scoped memory for tpu_custom_call.1']
    #allocation5 [shape = 'u8[4096]{0}', space=vmem, size = 0x1000, scoped, tag = 'input window, operand 1, single buffered']
    #allocation6 [shape = 's32[1]{0}', space=sflag, size = 0x4, scoped, tag = 'scoped memory for tpu_custom_call.1']
    #allocation7 [shape = 'u8[32768]{0}', space=vmem, size = 0x8000, scoped, tag = 'input window, operand 2, single buffered']
    #allocation8 [shape = 'u8[32768]{0}', space=vmem, size = 0x8000, scoped, tag = 'input window, operand 4, single buffered']
    #allocation9 [shape = 's32[1]{0}', space=sflag, size = 0x4, scoped, tag = 'scoped memory for tpu_custom_call.1']
    #allocation10 [shape = 'u8[32768]{0}', space=vmem, size = 0x8000, scoped, tag = 'input window, operand 6, single buffered']
    #allocation11 [shape = 'u8[32768]{0}', space=vmem, size = 0x8000, scoped, tag = 'input window, operand 7, single buffered']
    #allocation12 [shape = 's32[1]{0}', space=sflag, size = 0x4, scoped, tag = 'scoped memory for tpu_custom_call.1']
    #allocation13 [shape = 'u8[4096]{0}', space=vmem, size = 0x1000, scoped, tag = 'output window, operand 0, single buffered']
    %14 = vsyncpa [#allocation3], 0
    %15 = vsyncpa [#allocation6], 0
    %16 = vsyncpa [#allocation9], 0
    %17 = vsyncpa [#allocation12], 0
    %18 = vsyncpa [#allocation4], 0
    // Predicated region
    $region2: #{tpu_custom_call.1} parent=1 // pred_check
      _
    $region3: #{tpu_custom_call.1} parent=1 // pred_check_branch
      %20 = sbr.rel (0) target = $region5
    $region4: #{tpu_custom_call.1} parent=1 // pred_region
      %s22 = ssub.s32 128, 128
      %23 = vsyncadd [#allocation3], %s22
      %s25 = sshll.u32 [#allocation2], 4
      %s26 = int_to_ptr.vmem [resolvable:$true] %s25
      %28 = dma.hbm_to_vmem [thread:$0]  %s0, 128, %s26, [#allocation3]
    $region5: #{tpu_custom_call.1} parent=1 // pred_fallthru
      _
    // Predicated region
    $region6: #{tpu_custom_call.1} parent=1 // pred_check
      _
    $region7: #{tpu_custom_call.1} parent=1 // pred_check_branch
      %30 = sbr.rel (0) target = $region9
    $region8: #{tpu_custom_call.1} parent=1 // pred_region
      %s32 = ssub.s32 128, 128
      %33 = vsyncadd [#allocation6], %s32
      %s35 = sshll.u32 [#allocation5], 4
      %s36 = int_to_ptr.vmem [resolvable:$true] %s35
      %38 = dma.hbm_to_vmem [thread:$0]  %s1, 128, %s36, [#allocation6]
    $region9: #{tpu_custom_call.1} parent=1 // pred_fallthru
      _
    // Predicated region
    $region10: #{tpu_custom_call.1} parent=1 // pred_check
      _
    $region11: #{tpu_custom_call.1} parent=1 // pred_check_branch
      %40 = sbr.rel (0) target = $region13
    $region12: #{tpu_custom_call.1} parent=1 // pred_region
      %s42 = ssub.s32 1024, 1024
      %43 = vsyncadd [#allocation6], %s42
      %s44 = sshll.u32 [#allocation7], 4
      %s45 = int_to_ptr.vmem [resolvable:$true] %s44
      %50 = dma.hbm_to_vmem [thread:$0]  %s2, 1024, %s45, [#allocation6], 64, 64, 4
    $region13: #{tpu_custom_call.1} parent=1 // pred_fallthru
      _
    // Predicated region
    $region14: #{tpu_custom_call.1} parent=1 // pred_check
      _
    $region15: #{tpu_custom_call.1} parent=1 // pred_check_branch
      %52 = sbr.rel (0) target = $region17
    $region16: #{tpu_custom_call.1} parent=1 // pred_region
      _
    $region17: #{tpu_custom_call.1} parent=1 // pred_fallthru
      _
    // Predicated region
    $region18: #{tpu_custom_call.1} parent=1 // pred_check
      _
    $region19: #{tpu_custom_call.1} parent=1 // pred_check_branch
      %54 = sbr.rel (0) target = $region21
    $region20: #{tpu_custom_call.1} parent=1 // pred_region
      %s56 = ssub.s32 1024, 1024
      %57 = vsyncadd [#allocation9], %s56
      %s58 = sshll.u32 [#allocation8], 4
      %s59 = int_to_ptr.vmem [resolvable:$true] %s58
      %64 = dma.hbm_to_vmem [thread:$0]  %s4, 1024, %s59, [#allocation9], 64, 64, 4
    $region21: #{tpu_custom_call.1} parent=1 // pred_fallthru
      _
    // Predicated region
    $region22: #{tpu_custom_call.1} parent=1 // pred_check
      _
    $region23: #{tpu_custom_call.1} parent=1 // pred_check_branch
      %66 = sbr.rel (0) target = $region25
    $region24: #{tpu_custom_call.1} parent=1 // pred_region
      _
    $region25: #{tpu_custom_call.1} parent=1 // pred_fallthru
      _
    // Predicated region
    $region26: #{tpu_custom_call.1} parent=1 // pred_check
      _
    $region27: #{tpu_custom_call.1} parent=1 // pred_check_branch
      %68 = sbr.rel (0) target = $region29
    $region28: #{tpu_custom_call.1} parent=1 // pred_region
      %s70 = ssub.s32 1024, 1024
      %71 = vsyncadd [#allocation9], %s70
      %s72 = sshll.u32 [#allocation10], 4
      %s73 = int_to_ptr.vmem [resolvable:$true] %s72
      %78 = dma.hbm_to_vmem [thread:$0]  %s6, 1024, %s73, [#allocation9], 64, 64, 4
    $region29: #{tpu_custom_call.1} parent=1 // pred_fallthru
      _
    // Predicated region
    $region30: #{tpu_custom_call.1} parent=1 // pred_check
      _
    $region31: #{tpu_custom_call.1} parent=1 // pred_check_branch
      %80 = sbr.rel (0) target = $region33
    $region32: #{tpu_custom_call.1} parent=1 // pred_region
      %s82 = ssub.s32 1024, 1024
      %83 = vsyncadd [#allocation12], %s82
      %s84 = sshll.u32 [#allocation11], 4
      %s85 = int_to_ptr.vmem [resolvable:$true] %s84
      %90 = dma.hbm_to_vmem [thread:$0]  %s7, 1024, %s85, [#allocation12], 64, 64, 4
    $region33: #{tpu_custom_call.1} parent=1 // pred_fallthru
      _
    // Predicated region
    $region34: #{tpu_custom_call.1} parent=1 // pred_check
      _
    $region35: #{tpu_custom_call.1} parent=1 // pred_check_branch
      %92 = sbr.rel (0) target = $region37
    $region36: #{tpu_custom_call.1} parent=1 // pred_region
      _
    $region37: #{tpu_custom_call.1} parent=1 // pred_fallthru
      _
    // Predicated region
    $region38: #{tpu_custom_call.1} parent=1 // pred_check
      _
    $region39: #{tpu_custom_call.1} parent=1 // pred_check_branch
      %94 = sbr.rel (0) target = $region41
    $region40: #{tpu_custom_call.1} parent=1 // pred_region
      %95 = dma.done [#allocation3], 128
    $region41: #{tpu_custom_call.1} parent=1 // pred_fallthru
      _
    // Predicated region
    $region42: #{tpu_custom_call.1} parent=1 // pred_check
      _
    $region43: #{tpu_custom_call.1} parent=1 // pred_check_branch
      %97 = sbr.rel (0) target = $region45
    $region44: #{tpu_custom_call.1} parent=1 // pred_region
      %98 = dma.done [#allocation6], 128
    $region45: #{tpu_custom_call.1} parent=1 // pred_fallthru
      _
    // Predicated region
    $region46: #{tpu_custom_call.1} parent=1 // pred_check
      _
    $region47: #{tpu_custom_call.1} parent=1 // pred_check_branch
      %100 = sbr.rel (0) target = $region49
    $region48: #{tpu_custom_call.1} parent=1 // pred_region
      %101 = dma.done [#allocation6], 1024
    $region49: #{tpu_custom_call.1} parent=1 // pred_fallthru
      _
    // Predicated region
    $region50: #{tpu_custom_call.1} parent=1 // pred_check
      _
    $region51: #{tpu_custom_call.1} parent=1 // pred_check_branch
      %103 = sbr.rel (0) target = $region53
    $region52: #{tpu_custom_call.1} parent=1 // pred_region
      %104 = dma.done [#allocation9], 1024
    $region53: #{tpu_custom_call.1} parent=1 // pred_fallthru
      _
    // Predicated region
    $region54: #{tpu_custom_call.1} parent=1 // pred_check
      _
    $region55: #{tpu_custom_call.1} parent=1 // pred_check_branch
      %106 = sbr.rel (0) target = $region57
    $region56: #{tpu_custom_call.1} parent=1 // pred_region
      %107 = dma.done [#allocation9], 1024
    $region57: #{tpu_custom_call.1} parent=1 // pred_fallthru
      _
    // Predicated region
    $region58: #{tpu_custom_call.1} parent=1 // pred_check
      _
    $region59: #{tpu_custom_call.1} parent=1 // pred_check_branch
      %109 = sbr.rel (0) target = $region61
    $region60: #{tpu_custom_call.1} parent=1 // pred_region
      %110 = dma.done [#allocation12], 1024
    $region61: #{tpu_custom_call.1} parent=1 // pred_fallthru
      _
    %v112 = vld [vmem:[#allocation2] sm:$0xff]
    %v113 = vld [vmem:[#allocation5] sm:$0xff]
    %v114 = vpack.c.bf16 %v112, %v112
    %v115 = vpack.c.bf16 %v113, %v113
    %v116 = vld [vmem:[#allocation7] sm:$0xf]
    %v117 = vld [vmem:[#allocation7 + $0x4] sm:$0xf]
    %v118 = vld [vmem:[#allocation7 + $0x8] sm:$0xf]
    %v119 = vld [vmem:[#allocation7 + $0xc] sm:$0xf]
    %v120 = vld [vmem:[#allocation7 + $0x10] sm:$0xf]
    %v121 = vld [vmem:[#allocation7 + $0x14] sm:$0xf]
    %v122 = vld [vmem:[#allocation7 + $0x18] sm:$0xf]
    %v123 = vld [vmem:[#allocation7 + $0x1c] sm:$0xf]
    %v124 = vld [vmem:[#allocation7 + $0x20] sm:$0xf]
    %v125 = vld [vmem:[#allocation7 + $0x24] sm:$0xf]
    %v126 = vld [vmem:[#allocation7 + $0x28] sm:$0xf]
    %v127 = vld [vmem:[#allocation7 + $0x2c] sm:$0xf]
    %v128 = vld [vmem:[#allocation7 + $0x30] sm:$0xf]
    %v129 = vld [vmem:[#allocation7 + $0x34] sm:$0xf]
    %v130 = vld [vmem:[#allocation7 + $0x38] sm:$0xf]
    %v131 = vld [vmem:[#allocation7 + $0x3c] sm:$0xf]
    %v132 = vld [vmem:[%s3] sm:$0x1]
    %v134 = vlaneseq
    %v135 = vshrl.u32 %v134, 7
    %v136 = vsub.s32 0, %v135
    %v137 = vrot.slane %v132, %v136
    %v155 = vunpack.c.l.b16 %v116
    %v156 = vunpack.c.l.b16 %v117
    %v157 = vunpack.c.l.b16 %v118
    %v158 = vunpack.c.l.b16 %v119
    %v159 = vunpack.c.l.b16 %v120
    %v160 = vunpack.c.l.b16 %v121
    %v161 = vunpack.c.l.b16 %v122
    %v162 = vunpack.c.l.b16 %v123
    %v163 = vunpack.c.l.b16 %v124
    %v164 = vunpack.c.l.b16 %v125
    %v165 = vunpack.c.l.b16 %v126
    %v166 = vunpack.c.l.b16 %v127
    %v167 = vunpack.c.l.b16 %v128
    %v168 = vunpack.c.l.b16 %v129
    %v169 = vunpack.c.l.b16 %v130
    %v170 = vunpack.c.l.b16 %v131
    %v171 = vpack.c.b16 %v156, %v155
    %v172 = vpack.c.b16 %v158, %v157
    %v173 = vpack.c.b16 %v160, %v159
    %v174 = vpack.c.b16 %v162, %v161
    %v175 = vpack.c.b16 %v164, %v163
    %v176 = vpack.c.b16 %v166, %v165
    %v177 = vpack.c.b16 %v168, %v167
    %v178 = vpack.c.b16 %v170, %v169
    %187 = vmatprep.subr.bf16.mxu0 0
    %188 = vmatpush1.bf16.msra.mxu0 %v171
    %189 = vmatprep.subr.bf16.mxu0 0
    %190 = vmatpush1.bf16.msra.mxu0 %v172
    %191 = vmatprep.subr.bf16.mxu0 0
    %192 = vmatpush1.bf16.msra.mxu0 %v173
    %193 = vmatprep.subr.bf16.mxu0 0
    %194 = vmatpush1.bf16.msra.mxu0 %v174
    %195 = vmatprep.subr.bf16.mxu0 0
    %196 = vmatpush1.bf16.msra.mxu0 %v175
    %197 = vmatprep.subr.bf16.mxu0 0
    %198 = vmatpush1.bf16.msra.mxu0 %v176
    %199 = vmatprep.subr.bf16.mxu0 0
    %200 = vmatpush1.bf16.msra.mxu0 %v177
    %201 = vmatprep.subr.bf16.mxu0 0
    %202 = vmatpush1.bf16.msra.mxu0 %v178
    %203 = vmatprep.subr.bf16.mxu0 0
    %204 = vmatpush1.bf16.msra.mxu0 0
    %205 = vmatprep.subr.bf16.mxu0 0
    %206 = vmatpush1.bf16.msra.mxu0 0
    %207 = vmatprep.subr.bf16.mxu0 0
    %208 = vmatpush1.bf16.msra.mxu0 0
    %209 = vmatprep.subr.bf16.mxu0 0
    %210 = vmatpush1.bf16.msra.mxu0 0
    %211 = vmatprep.subr.bf16.mxu0 0
    %212 = vmatpush1.bf16.msra.mxu0 0
    %213 = vmatprep.subr.bf16.mxu0 0
    %214 = vmatpush1.bf16.msra.mxu0 0
    %215 = vmatprep.subr.bf16.mxu0 0
    %216 = vmatpush1.bf16.msra.mxu0 0
    %217 = vmatprep.subr.bf16.mxu0 0
    %218 = vmatpush1.bf16.msra.mxu0 0
    %219 = vmatprep.mubr.bf16.mxu0 0
    %220 = vmatmul.mubr.bf16.gmra.mrb[0].mxu0 %v114
    %v221 = vpop.f32.mrb[0].mxu0
    %v222 = vadd.f32 %v137, %v221
    %v223 = vpop.f32.mrb[0].mxu0
    %v224 = vpop.f32.mrb[0].mxu0
    %v225 = vpop.f32.mrb[0].mxu0
    %226 = vdwg.mxu0
    %v227 = vld [vmem:[#allocation8] sm:$0xf]
    %v228 = vld [vmem:[#allocation8 + $0x4] sm:$0xf]
    %v229 = vld [vmem:[#allocation8 + $0x8] sm:$0xf]
    %v230 = vld [vmem:[#allocation8 + $0xc] sm:$0xf]
    %v231 = vld [vmem:[#allocation8 + $0x10] sm:$0xf]
    %v232 = vld [vmem:[#allocation8 + $0x14] sm:$0xf]
    %v233 = vld [vmem:[#allocation8 + $0x18] sm:$0xf]
    %v234 = vld [vmem:[#allocation8 + $0x1c] sm:$0xf]
    %v235 = vld [vmem:[#allocation8 + $0x20] sm:$0xf]
    %v236 = vld [vmem:[#allocation8 + $0x24] sm:$0xf]
    %v237 = vld [vmem:[#allocation8 + $0x28] sm:$0xf]
    %v238 = vld [vmem:[#allocation8 + $0x2c] sm:$0xf]
    %v239 = vld [vmem:[#allocation8 + $0x30] sm:$0xf]
    %v240 = vld [vmem:[#allocation8 + $0x34] sm:$0xf]
    %v241 = vld [vmem:[#allocation8 + $0x38] sm:$0xf]
    %v242 = vld [vmem:[#allocation8 + $0x3c] sm:$0xf]
    %v243 = vld [vmem:[%s5] sm:$0x1]
    %v245 = vlaneseq
    %v246 = vshrl.u32 %v245, 7
    %v247 = vsub.s32 0, %v246
    %v248 = vrot.slane %v243, %v247
    %v266 = vunpack.c.l.b16 %v227
    %v267 = vunpack.c.l.b16 %v228
    %v268 = vunpack.c.l.b16 %v229
    %v269 = vunpack.c.l.b16 %v230
    %v270 = vunpack.c.l.b16 %v231
    %v271 = vunpack.c.l.b16 %v232
    %v272 = vunpack.c.l.b16 %v233
    %v273 = vunpack.c.l.b16 %v234
    %v274 = vunpack.c.l.b16 %v235
    %v275 = vunpack.c.l.b16 %v236
    %v276 = vunpack.c.l.b16 %v237
    %v277 = vunpack.c.l.b16 %v238
    %v278 = vunpack.c.l.b16 %v239
    %v279 = vunpack.c.l.b16 %v240
    %v280 = vunpack.c.l.b16 %v241
    %v281 = vunpack.c.l.b16 %v242
    %v282 = vpack.c.b16 %v267, %v266
    %v283 = vpack.c.b16 %v269, %v268
    %v284 = vpack.c.b16 %v271, %v270
    %v285 = vpack.c.b16 %v273, %v272
    %v286 = vpack.c.b16 %v275, %v274
    %v287 = vpack.c.b16 %v277, %v276
    %v288 = vpack.c.b16 %v279, %v278
    %v289 = vpack.c.b16 %v281, %v280
    %298 = vmatprep.subr.bf16.mxu0 0
    %299 = vmatpush1.bf16.msra.mxu0 %v282
    %300 = vmatprep.subr.bf16.mxu0 0
    %301 = vmatpush1.bf16.msra.mxu0 %v283
    %302 = vmatprep.subr.bf16.mxu0 0
    %303 = vmatpush1.bf16.msra.mxu0 %v284
    %304 = vmatprep.subr.bf16.mxu0 0
    %305 = vmatpush1.bf16.msra.mxu0 %v285
    %306 = vmatprep.subr.bf16.mxu0 0
    %307 = vmatpush1.bf16.msra.mxu0 %v286
    %308 = vmatprep.subr.bf16.mxu0 0
    %309 = vmatpush1.bf16.msra.mxu0 %v287
    %310 = vmatprep.subr.bf16.mxu0 0
    %311 = vmatpush1.bf16.msra.mxu0 %v288
    %312 = vmatprep.subr.bf16.mxu0 0
    %313 = vmatpush1.bf16.msra.mxu0 %v289
    %314 = vmatprep.subr.bf16.mxu0 0
    %315 = vmatpush1.bf16.msra.mxu0 0
    %316 = vmatprep.subr.bf16.mxu0 0
    %317 = vmatpush1.bf16.msra.mxu0 0
    %318 = vmatprep.subr.bf16.mxu0 0
    %319 = vmatpush1.bf16.msra.mxu0 0
    %320 = vmatprep.subr.bf16.mxu0 0
    %321 = vmatpush1.bf16.msra.mxu0 0
    %322 = vmatprep.subr.bf16.mxu0 0
    %323 = vmatpush1.bf16.msra.mxu0 0
    %324 = vmatprep.subr.bf16.mxu0 0
    %325 = vmatpush1.bf16.msra.mxu0 0
    %326 = vmatprep.subr.bf16.mxu0 0
    %327 = vmatpush1.bf16.msra.mxu0 0
    %328 = vmatprep.subr.bf16.mxu0 0
    %329 = vmatpush1.bf16.msra.mxu0 0
    %330 = vmatprep.mubr.bf16.mxu0 0
    %331 = vmatmul.mubr.bf16.gmra.mrb[0].mxu0 %v115
    %v332 = vpop.f32.mrb[0].mxu0
    %v333 = vadd.f32 %v248, %v332
    %v334 = vpop.f32.mrb[0].mxu0
    %v335 = vpop.f32.mrb[0].mxu0
    %v336 = vpop.f32.mrb[0].mxu0
    %337 = vdwg.mxu0
    %v338 = vpack.c.bf16 %v222, %v222
    %v339 = vld [vmem:[#allocation10] sm:$0xf]
    %v340 = vld [vmem:[#allocation10 + $0x4] sm:$0xf]
    %v341 = vld [vmem:[#allocation10 + $0x8] sm:$0xf]
    %v342 = vld [vmem:[#allocation10 + $0xc] sm:$0xf]
    %v343 = vld [vmem:[#allocation10 + $0x10] sm:$0xf]
    %v344 = vld [vmem:[#allocation10 + $0x14] sm:$0xf]
    %v345 = vld [vmem:[#allocation10 + $0x18] sm:$0xf]
    %v346 = vld [vmem:[#allocation10 + $0x1c] sm:$0xf]
    %v347 = vld [vmem:[#allocation10 + $0x20] sm:$0xf]
    %v348 = vld [vmem:[#allocation10 + $0x24] sm:$0xf]
    %v349 = vld [vmem:[#allocation10 + $0x28] sm:$0xf]
    %v350 = vld [vmem:[#allocation10 + $0x2c] sm:$0xf]
    %v351 = vld [vmem:[#allocation10 + $0x30] sm:$0xf]
    %v352 = vld [vmem:[#allocation10 + $0x34] sm:$0xf]
    %v353 = vld [vmem:[#allocation10 + $0x38] sm:$0xf]
    %v354 = vld [vmem:[#allocation10 + $0x3c] sm:$0xf]
    %v355 = vpack.c.bf16 %v333, %v333
    %v356 = vld [vmem:[#allocation11] sm:$0xf]
    %v357 = vld [vmem:[#allocation11 + $0x4] sm:$0xf]
    %v358 = vld [vmem:[#allocation11 + $0x8] sm:$0xf]
    %v359 = vld [vmem:[#allocation11 + $0xc] sm:$0xf]
    %v360 = vld [vmem:[#allocation11 + $0x10] sm:$0xf]
    %v361 = vld [vmem:[#allocation11 + $0x14] sm:$0xf]
    %v362 = vld [vmem:[#allocation11 + $0x18] sm:$0xf]
    %v363 = vld [vmem:[#allocation11 + $0x1c] sm:$0xf]
    %v364 = vld [vmem:[#allocation11 + $0x20] sm:$0xf]
    %v365 = vld [vmem:[#allocation11 + $0x24] sm:$0xf]
    %v366 = vld [vmem:[#allocation11 + $0x28] sm:$0xf]
    %v367 = vld [vmem:[#allocation11 + $0x2c] sm:$0xf]
    %v368 = vld [vmem:[#allocation11 + $0x30] sm:$0xf]
    %v369 = vld [vmem:[#allocation11 + $0x34] sm:$0xf]
    %v370 = vld [vmem:[#allocation11 + $0x38] sm:$0xf]
    %v371 = vld [vmem:[#allocation11 + $0x3c] sm:$0xf]
    %v388 = vunpack.c.l.b16 %v356
    %v389 = vunpack.c.l.b16 %v357
    %v390 = vunpack.c.l.b16 %v358
    %v391 = vunpack.c.l.b16 %v359
    %v392 = vunpack.c.l.b16 %v360
    %v393 = vunpack.c.l.b16 %v361
    %v394 = vunpack.c.l.b16 %v362
    %v395 = vunpack.c.l.b16 %v363
    %v396 = vunpack.c.l.b16 %v364
    %v397 = vunpack.c.l.b16 %v365
    %v398 = vunpack.c.l.b16 %v366
    %v399 = vunpack.c.l.b16 %v367
    %v400 = vunpack.c.l.b16 %v368
    %v401 = vunpack.c.l.b16 %v369
    %v402 = vunpack.c.l.b16 %v370
    %v403 = vunpack.c.l.b16 %v371
    %v404 = vpack.c.b16 %v389, %v388
    %v405 = vpack.c.b16 %v391, %v390
    %v406 = vpack.c.b16 %v393, %v392
    %v407 = vpack.c.b16 %v395, %v394
    %v408 = vpack.c.b16 %v397, %v396
    %v409 = vpack.c.b16 %v399, %v398
    %v410 = vpack.c.b16 %v401, %v400
    %v411 = vpack.c.b16 %v403, %v402
    %420 = vmatprep.subr.bf16.mxu0 0
    %421 = vmatpush1.bf16.msra.mxu0 %v404
    %422 = vmatprep.subr.bf16.mxu0 0
    %423 = vmatpush1.bf16.msra.mxu0 %v405
    %424 = vmatprep.subr.bf16.mxu0 0
    %425 = vmatpush1.bf16.msra.mxu0 %v406
    %426 = vmatprep.subr.bf16.mxu0 0
    %427 = vmatpush1.bf16.msra.mxu0 %v407
    %428 = vmatprep.subr.bf16.mxu0 0
    %429 = vmatpush1.bf16.msra.mxu0 %v408
    %430 = vmatprep.subr.bf16.mxu0 0
    %431 = vmatpush1.bf16.msra.mxu0 %v409
    %432 = vmatprep.subr.bf16.mxu0 0
    %433 = vmatpush1.bf16.msra.mxu0 %v410
    %434 = vmatprep.subr.bf16.mxu0 0
    %435 = vmatpush1.bf16.msra.mxu0 %v411
    %436 = vmatprep.subr.bf16.mxu0 0
    %437 = vmatpush1.bf16.msra.mxu0 0
    %438 = vmatprep.subr.bf16.mxu0 0
    %439 = vmatpush1.bf16.msra.mxu0 0
    %440 = vmatprep.subr.bf16.mxu0 0
    %441 = vmatpush1.bf16.msra.mxu0 0
    %442 = vmatprep.subr.bf16.mxu0 0
    %443 = vmatpush1.bf16.msra.mxu0 0
    %444 = vmatprep.subr.bf16.mxu0 0
    %445 = vmatpush1.bf16.msra.mxu0 0
    %446 = vmatprep.subr.bf16.mxu0 0
    %447 = vmatpush1.bf16.msra.mxu0 0
    %448 = vmatprep.subr.bf16.mxu0 0
    %449 = vmatpush1.bf16.msra.mxu0 0
    %450 = vmatprep.subr.bf16.mxu0 0
    %451 = vmatpush1.bf16.msra.mxu0 0
    %452 = vmatprep.mubr.bf16.mxu0 0
    %453 = vmatmul.mubr.bf16.gmra.mrb[0].mxu0 %v355
    %v454 = vpop.f32.mrb[0].mxu0
    %v455 = vadd.f32 0.0, %v454
    %v456 = vpop.f32.mrb[0].mxu0
    %v457 = vpop.f32.mrb[0].mxu0
    %v458 = vpop.f32.mrb[0].mxu0
    %459 = vdwg.mxu0
    %v476 = vunpack.c.l.b16 %v339
    %v477 = vunpack.c.l.b16 %v340
    %v478 = vunpack.c.l.b16 %v341
    %v479 = vunpack.c.l.b16 %v342
    %v480 = vunpack.c.l.b16 %v343
    %v481 = vunpack.c.l.b16 %v344
    %v482 = vunpack.c.l.b16 %v345
    %v483 = vunpack.c.l.b16 %v346
    %v484 = vunpack.c.l.b16 %v347
    %v485 = vunpack.c.l.b16 %v348
    %v486 = vunpack.c.l.b16 %v349
    %v487 = vunpack.c.l.b16 %v350
    %v488 = vunpack.c.l.b16 %v351
    %v489 = vunpack.c.l.b16 %v352
    %v490 = vunpack.c.l.b16 %v353
    %v491 = vunpack.c.l.b16 %v354
    %v492 = vpack.c.b16 %v477, %v476
    %v493 = vpack.c.b16 %v479, %v478
    %v494 = vpack.c.b16 %v481, %v480
    %v495 = vpack.c.b16 %v483, %v482
    %v496 = vpack.c.b16 %v485, %v484
    %v497 = vpack.c.b16 %v487, %v486
    %v498 = vpack.c.b16 %v489, %v488
    %v499 = vpack.c.b16 %v491, %v490
    %508 = vmatprep.subr.bf16.mxu0 0
    %509 = vmatpush1.bf16.msra.mxu0 %v492
    %510 = vmatprep.subr.bf16.mxu0 0
    %511 = vmatpush1.bf16.msra.mxu0 %v493
    %512 = vmatprep.subr.bf16.mxu0 0
    %513 = vmatpush1.bf16.msra.mxu0 %v494
    %514 = vmatprep.subr.bf16.mxu0 0
    %515 = vmatpush1.bf16.msra.mxu0 %v495
    %516 = vmatprep.subr.bf16.mxu0 0
    %517 = vmatpush1.bf16.msra.mxu0 %v496
    %518 = vmatprep.subr.bf16.mxu0 0
    %519 = vmatpush1.bf16.msra.mxu0 %v497
    %520 = vmatprep.subr.bf16.mxu0 0
    %521 = vmatpush1.bf16.msra.mxu0 %v498
    %522 = vmatprep.subr.bf16.mxu0 0
    %523 = vmatpush1.bf16.msra.mxu0 %v499
    %524 = vmatprep.subr.bf16.mxu0 0
    %525 = vmatpush1.bf16.msra.mxu0 0
    %526 = vmatprep.subr.bf16.mxu0 0
    %527 = vmatpush1.bf16.msra.mxu0 0
    %528 = vmatprep.subr.bf16.mxu0 0
    %529 = vmatpush1.bf16.msra.mxu0 0
    %530 = vmatprep.subr.bf16.mxu0 0
    %531 = vmatpush1.bf16.msra.mxu0 0
    %532 = vmatprep.subr.bf16.mxu0 0
    %533 = vmatpush1.bf16.msra.mxu0 0
    %534 = vmatprep.subr.bf16.mxu0 0
    %535 = vmatpush1.bf16.msra.mxu0 0
    %536 = vmatprep.subr.bf16.mxu0 0
    %537 = vmatpush1.bf16.msra.mxu0 0
    %538 = vmatprep.subr.bf16.mxu0 0
    %539 = vmatpush1.bf16.msra.mxu0 0
    %540 = vmatprep.mubr.bf16.mxu0 0
    %541 = vmatmul.mubr.bf16.gmra.mrb[0].mxu0 %v338
    %v542 = vpop.f32.mrb[0].mxu0
    %v543 = vadd.f32 %v455, %v542
    %v544 = vpop.f32.mrb[0].mxu0
    %v545 = vpop.f32.mrb[0].mxu0
    %v546 = vpop.f32.mrb[0].mxu0
    %547 = vdwg.mxu0
    %v548 = vld [vmem:[%s8] sm:$0x1]
    %v550 = vlaneseq
    %v551 = vshrl.u32 %v550, 7
    %v552 = vsub.s32 0, %v551
    %v553 = vrot.slane %v548, %v552
    %v555 = vadd.f32 %v543, %v553
    %v556 = vxor.u32 %v555, 2147483648
    %v557 = vmul.f32 %v556, 1.442695
    %v558 = vpow.pop %v557
    %v559 = vadd.f32 %v558, 1.0
    %v560 = vrcp.pop %v559
    %v561 = vmul.f32 1.0, %v560
    %v562 = vsub.f32 %v222, %v333
    %v563 = vmul.f32 %v561, %v562
    %v564 = vadd.f32 %v333, %v563
    %565 = vst [vmem:[#allocation13] sm:$0xff] %v564
    // Predicated region
    $region62: #{tpu_custom_call.1} parent=1 // pred_check
      _
    $region63: #{tpu_custom_call.1} parent=1 // pred_check_branch
      %567 = sbr.rel (0) target = $region65
    $region64: #{tpu_custom_call.1} parent=1 // pred_region
      %s569 = ssub.s32 128, 128
      %570 = vsyncadd [#allocation4], %s569
      %s572 = sshll.u32 [#allocation13], 4
      %s573 = int_to_ptr.vmem [resolvable:$true] %s572
      %575 = dma.vmem_to_hbm [thread:$0]  %s573, 128, %s9, [#allocation4]
    $region65: #{tpu_custom_call.1} parent=1 // pred_fallthru
      _
    // Predicated region
    $region66: #{tpu_custom_call.1} parent=1 // pred_check
      _
    $region67: #{tpu_custom_call.1} parent=1 // pred_check_branch
      %577 = sbr.rel (0) target = $region69
    $region68: #{tpu_custom_call.1} parent=1 // pred_region
      %578 = dma.done [#allocation4], 128
    $region69: #{tpu_custom_call.1} parent=1 // pred_fallthru
      _
    %579 = vsyncpa [#allocation3], 1
    %580 = vsyncpa [#allocation6], 1
    %581 = vsyncpa [#allocation9], 1
    %582 = vsyncpa [#allocation12], 1
    %583 = vsyncpa [#allocation4], 1

</llo_original>
